<compile_context>
chip_gen: v6e
topology: v6e:2x2x1
jax: 0.10.0
libtpu: 0.0.40
codegen_flags: <defaults>
</compile_context>

<pallas_src>
import functools

import numpy as np
import jax
import jax.numpy as jnp
from jax import lax
from jax.experimental import pallas as pl
from jax.experimental.pallas import tpu as pltpu


def _round_up(x, m):
    return ((x + m - 1) // m) * m


def _embedding_gather_kernel(x_ref, off_ref, table_ref, out_ref, *,
                             chunk, num_fields):
    """One grid step gathers `chunk` rows from the VMEM-resident table.

    x_ref, off_ref : SMEM scalar-prefetch refs (flat ids, per-field offsets)
    table_ref      : (V, D) VMEM, resident across all grid steps
    out_ref        : (chunk, D) VMEM output tile for this grid step
    """
    base = pl.program_id(0) * chunk

    def body(r, carry):
        p = base + r                                  # global lookup position
        row = x_ref[p] + off_ref[p % num_fields]      # fused offset add (scalar unit)
        out_ref[pl.ds(r, 1), :] = table_ref[pl.ds(row, 1), :]
        return carry

    lax.fori_loop(0, chunk, body, 0)


def embedding_lookup(flat_x, offsets, table, num_fields, max_chunk=512):
    """flat_x: (N,) int32 raw per-field ids (offsets NOT yet added);
    offsets: (F,) int32; table: (V, D) f32  ->  (N, D) f32 gathered rows."""
    n = flat_x.shape[0]
    v, d = table.shape

    # Lookups per grid step: large enough to amortize per-step overhead and
    # give a sublane-dense output tile, small enough not to over-pad tiny
    # batches. Must be a multiple of 8 (sublanes).
    chunk = min(_round_up(max_chunk, 8), _round_up(n, 8))
    n_pad = _round_up(n, chunk)
    num_chunks = n_pad // chunk
    if n_pad != n:
        # padded id 0 + a valid per-field offset is always in-range;
        # padded rows are sliced off below.
        flat_x = jnp.pad(flat_x, (0, n_pad - n))

    # VMEM budget: resident table + double-buffered output tiles + slack.
    itemsize = jnp.dtype(table.dtype).itemsize
    vmem_need = v * d * itemsize + 2 * chunk * d * itemsize + (1 << 20)
    vmem_limit = int(min(max(2 * vmem_need, 32 << 20), 48 << 20))  # v7x-safe cap

    kernel = functools.partial(
        _embedding_gather_kernel, chunk=chunk, num_fields=num_fields)

    out = pl.pallas_call(
        kernel,
        out_shape=jax.ShapeDtypeStruct((n_pad, d), table.dtype),
        grid_spec=pltpu.PrefetchScalarGridSpec(
            num_scalar_prefetch=2,               # flat_x, offsets -> SMEM
            grid=(num_chunks,),
            in_specs=[
                # full table, constant block index -> loaded once, kept in VMEM
                pl.BlockSpec((v, d), lambda c, xs, os: (0, 0)),
            ],
            out_specs=pl.BlockSpec((chunk, d), lambda c, xs, os: (c, 0)),
        ),
        compiler_params=pltpu.CompilerParams(
            dimension_semantics=("parallel",),   # chunks independent (v7x 2xTC)
            vmem_limit_bytes=vmem_limit),
    )(flat_x, offsets, table)

    return out[:n]


class EmbeddingLayer:
    """JAX/Pallas port of the PyTorch EmbeddingLayer."""

    def __init__(self, field_dims, embed_dim, key):
        vocab = int(sum(field_dims))
        # torch.nn.init.xavier_uniform_ on (vocab, embed_dim):
        # bound = sqrt(6 / (fan_in + fan_out))
        bound = float(np.sqrt(6.0 / (vocab + embed_dim)))
        self.weight = jax.random.uniform(
            key, (vocab, embed_dim), jnp.float32, minval=-bound, maxval=bound)
        self.offsets = jnp.asarray(
            np.array((0, *np.cumsum(field_dims)[:-1]), dtype=np.int32))
        self.num_fields = len(field_dims)
        self.embed_dim = embed_dim

    def __call__(self, x):
        # x: (batch, num_fields) int32, per-field ids (offsets applied in-kernel)
        b, f = x.shape
        flat = x.reshape(-1).astype(jnp.int32)
        out = embedding_lookup(flat, self.offsets, self.weight, self.num_fields)
        return out.reshape(b, f, self.embed_dim)


if __name__ == "__main__":
    field_dims = (5, 7, 3, 9)   # vocab = 24
    embed_dim = 32
    batch = 2

    key = jax.random.PRNGKey(0)
    k_w, k_x = jax.random.split(key)
    layer = EmbeddingLayer(field_dims, embed_dim, k_w)

    # deterministic per-field indices in [0, field_dims[f])
    cols = [jax.random.randint(jax.random.fold_in(k_x, i),
                               (batch,), 0, fd, dtype=jnp.int32)
            for i, fd in enumerate(field_dims)]
    x = jnp.stack(cols, axis=1)          # (batch, num_fields)

    out = jax.block_until_ready(layer(x))

    # pure-JAX reference check
    ref = layer.weight[(x + layer.offsets[None, :]).reshape(-1)].reshape(
        batch, len(field_dims), embed_dim)
    assert out.shape == (batch, len(field_dims), embed_dim)
    assert out.dtype == jnp.float32
    assert jnp.allclose(out, ref)
    print("KERNEL_OK")
</pallas_src>

<mosaic_0001>
module attributes {stable_mosaic.version = 11 : i64} {
  func.func @_embedding_gather_kernel(%arg0: i32, %arg1: memref<8xi32, #tpu.memory_space<smem>>, %arg2: memref<4xi32, #tpu.memory_space<smem>>, %arg3: memref<24x32xf32, #tpu.memory_space<vmem>>, %arg4: memref<8x32xf32, #tpu.memory_space<vmem>>) attributes {dimension_semantics = [#tpu.dimension_semantics<parallel>], iteration_bounds = array<i64: 1>, scalar_prefetch = 2 : i64, scratch_operands = 0 : i64, tpu.core_type = #tpu.core_type<tc>, window_params = [{pipeline_mode = #tpu.pipeline_mode<synchronous>, transform_indices = @transform_0, window_bounds = array<i64: 24, 32>}, {transform_indices = @transform_1, window_bounds = array<i64: 8, 32>}]} {
    %c8_i32 = arith.constant 8 : i32
    %0 = arith.muli %arg0, %c8_i32 : i32
    %c0_i32 = arith.constant 0 : i32
    %c8_i32_0 = arith.constant 8 : i32
    %1 = arith.addi %c0_i32, %c8_i32_0 : i32
    %c1_i32 = arith.constant 1 : i32
    scf.for %arg5 = %c0_i32 to %1 step %c1_i32  : i32 {
      %2 = arith.addi %0, %arg5 : i32
      %3 = arith.index_cast %2 : i32 to index
      %4 = memref.load %arg1[%3] : memref<8xi32, #tpu.memory_space<smem>>
      %c4_i32 = arith.constant 4 : i32
      %c0_i32_2 = arith.constant 0 : i32
      %5 = arith.cmpi eq, %c4_i32, %c0_i32_2 : i32
      %c1_i32_3 = arith.constant 1 : i32
      %6 = arith.select %5, %c1_i32_3, %c4_i32 : i32
      %7 = arith.remsi %2, %6 : i32
      %c0_i32_4 = arith.constant 0 : i32
      %8 = arith.cmpi ne, %7, %c0_i32_4 : i32
      %c0_i32_5 = arith.constant 0 : i32
      %9 = arith.cmpi slt, %7, %c0_i32_5 : i32
      %c0_i32_6 = arith.constant 0 : i32
      %10 = arith.cmpi slt, %6, %c0_i32_6 : i32
      %11 = arith.xori %9, %10 : i1
      %12 = arith.andi %11, %8 : i1
      %13 = arith.addi %7, %6 : i32
      %14 = arith.select %12, %13, %7 : i32
      %15 = arith.index_cast %14 : i32 to index
      %16 = memref.load %arg2[%15] : memref<4xi32, #tpu.memory_space<smem>>
      %17 = arith.addi %4, %16 : i32
      %18 = arith.index_cast %17 : i32 to index
      %c0 = arith.constant 0 : index
      %19 = vector.load %arg3[%18, %c0] : memref<24x32xf32, #tpu.memory_space<vmem>>, vector<1x32xf32>
      %20 = arith.index_cast %arg5 : i32 to index
      %c0_7 = arith.constant 0 : index
      %21 = vector.load %arg4[%20, %c0_7] : memref<8x32xf32, #tpu.memory_space<vmem>>, vector<1x32xf32>
      tpu.vector_store %arg4[%20, %c0_7], %19 {strides = array<i32>} : memref<8x32xf32, #tpu.memory_space<vmem>>, vector<1x32xf32>,
    }
    %c8_i32_1 = arith.constant 8 : i32
    return
  }
  func.func @transform_0(%arg0: i32, %arg1: memref<8xi32, #tpu.memory_space<smem>>, %arg2: memref<4xi32, #tpu.memory_space<smem>>) -> (i32, i32) {
    %c0_i32 = arith.constant 0 : i32
    %c0_i32_0 = arith.constant 0 : i32
    %c0_i32_1 = arith.constant 0 : i32
    return %c0_i32, %c0_i32_0 : i32, i32
  }
  func.func @transform_1(%arg0: i32, %arg1: memref<8xi32, #tpu.memory_space<smem>>, %arg2: memref<4xi32, #tpu.memory_space<smem>>) -> (i32, i32) {
    %c0_i32 = arith.constant 0 : i32
    %c0_i32_0 = arith.constant 0 : i32
    return %arg0, %c0_i32 : i32, i32
  }
}

</mosaic_0001>

<llo_original>
// kernel: tpu_custom_call.1
$region0: #{tpu_custom_call.1}
  #allocation0 [shape = 'u32[]', space=smem, size = 0x4, offset = 0x4, fixed_abs, tag = 'smem constant byte address 0x4 - core index']
  #allocation1 [shape = 'u32[144,128]{1,0:T(1,128)}', space=vmem, size = 0x12000, scoped, tag = 'internal scratch']
  #allocation2 [shape = 's32[1]{0}', space=sflag, size = 0x4, scoped, tag = 'scoped memory for tpu_custom_call.1']
  #allocation3 [shape = 'u8[512]{0}', space=smem, size = 0x200, scoped, tag = 'prefetched SMEM operand 0']
  #allocation4 [shape = 'u8[512]{0}', space=smem, size = 0x200, scoped, tag = 'prefetched SMEM operand 1']
  %s0 = inlined_call_operand.hbm [shape: s32[8], index: 0, kind: input, shape index: {}]
  %s1 = inlined_call_operand.vmem [shape: s32[4], index: 1, kind: input, shape index: {}]
  %s2 = inlined_call_operand.hbm [shape: f32[24,32], index: 2, kind: input, shape index: {}]
  %s3 = inlined_call_operand.hbm [shape: f32[8,32], index: 3, kind: output, shape index: {}]
  %s4 = sld [smem:[#allocation0]]
  $region25: #{tpu_custom_call.1} parent=0
    _
  %s6 = ssub.s32 1, %s4
  %s7 = scalar_select 0, %s6, %s4
  %9 = dma.hbm_to_smem %s0, 16, [#allocation3], [#allocation2]
  %s10 = sshll.u32 %s1, 4
  %s11 = int_to_ptr.vmem [resolvable:$true] %s10
  %13 = dma.vmem_to_smem %s11, 16, [#allocation4], [#allocation2]
  %14 = dma.done [#allocation2], 32
  %15 = sfence
  $region1: #{tpu_custom_call.1} parent=0
    #allocation5 [shape = 'u8[12288]{0}', space=vmem, size = 0x3000, scoped, tag = 'input window, operand 2, single buffered']
    #allocation6 [shape = 's32[1]{0}', space=sflag, size = 0x4, scoped, tag = 'scoped memory for tpu_custom_call.1']
    #allocation7 [shape = 's32[1]{0}', space=sflag, size = 0x4, scoped, tag = 'scoped memory for tpu_custom_call.1']
    #allocation8 [shape = 'u8[4096]{0}', space=vmem, size = 0x1000, scoped, tag = 'output window, operand 0, single buffered']
    %16 = vsyncpa [#allocation6], 0
    %17 = vsyncpa [#allocation7], 0
    // Predicated region
    $region2: #{tpu_custom_call.1} parent=1 // pred_check
      _
    $region3: #{tpu_custom_call.1} parent=1 // pred_check_branch
      %19 = sbr.rel (0) target = $region5
    $region4: #{tpu_custom_call.1} parent=1 // pred_region
      %s21 = ssub.s32 384, 384
      %22 = vsyncadd [#allocation6], %s21
      %s23 = sshll.u32 [#allocation5], 4
      %s24 = int_to_ptr.vmem [resolvable:$true] %s23
      %29 = dma.hbm_to_vmem [thread:$0]  %s2, 384, %s24, [#allocation6], 128, 128, 8
    $region5: #{tpu_custom_call.1} parent=1 // pred_fallthru
      _
    // Predicated region
    $region6: #{tpu_custom_call.1} parent=1 // pred_check
      _
    $region7: #{tpu_custom_call.1} parent=1 // pred_check_branch
      %31 = sbr.rel (0) target = $region9
    $region8: #{tpu_custom_call.1} parent=1 // pred_region
      %32 = dma.done [#allocation6], 384
    $region9: #{tpu_custom_call.1} parent=1 // pred_fallthru
      _
    %s33 = smul.u32 0, 8
    loop: start=0, step=1, limit=8
    $region10: #{tpu_custom_call.1} parent=1 // loop_pre_header
      _
    $region11: #{tpu_custom_call.1} parent=1 // loop_header
      %s35 = sphi 0, %s39
      %p36 = scmp.ge.s32.totalorder %s35, 8
    $region12: #{tpu_custom_call.1} parent=1 // loop_header_branch
      %38 = sbr.rel (%p36) target = $region16
    $region13: #{tpu_custom_call.1} parent=1 // loop_body
      %s40 = sadd.s32 %s33, %s35
      %s41 = sld [smem:[#allocation3 + %s40]]
      %p42 = scmp.lt.s32.totalorder %s40, 0
      %s43 = ssub.s32 0, %s40
      %s44 = scalar_select %p42, %s43, %s40
      %s45 = sand.u32 %s44, 3
      %s46 = ssub.s32 0, %s45
      %s47 = scalar_select %p42, %s46, %s45
      %p48 = scmp.ne.s32.totalorder %s47, 0
      %p49 = scmp.lt.s32.totalorder %s47, 0
      %p50 = pnand %p49, %p48
      %p51 = pneg %p50
      %s52 = sadd.s32 %s47, 4
      %s53 = scalar_select %p51, %s52, %s47
      %s54 = sld [smem:[#allocation4 + %s53]]
      %s55 = sadd.s32 %s41, %s54
      %s56 = scalar_lea.vmem [#allocation5], %s55
      %v57 = vld [vmem:[%s56] sm:$0x1]
      %s58 = scalar_lea.vmem [#allocation8], %s35
      %vm59 = vcmask 253952
      %60 = vst.msk [vmem:[%s58] sm:$0x1] %vm59, %v57
    $region14: #{tpu_custom_call.1} parent=1 // loop_footer
      %s39 = sadd.s32 1, %s35
    $region15: #{tpu_custom_call.1} parent=1 // loop_footer_branch
      %34 = sbr.rel target = $region11
    $region16: #{tpu_custom_call.1} parent=1 // loop_exit
      _
    // Predicated region
    $region17: #{tpu_custom_call.1} parent=1 // pred_check
      _
    $region18: #{tpu_custom_call.1} parent=1 // pred_check_branch
      %62 = sbr.rel (0) target = $region20
    $region19: #{tpu_custom_call.1} parent=1 // pred_region
      %s64 = ssub.s32 128, 128
      %65 = vsyncadd [#allocation7], %s64
      %s67 = sshll.u32 [#allocation8], 4
      %s68 = int_to_ptr.vmem [resolvable:$true] %s67
      %70 = dma.vmem_to_hbm [thread:$0]  %s68, 128, %s3, [#allocation7]
    $region20: #{tpu_custom_call.1} parent=1 // pred_fallthru
      _
    // Predicated region
    $region21: #{tpu_custom_call.1} parent=1 // pred_check
      _
    $region22: #{tpu_custom_call.1} parent=1 // pred_check_branch
      %72 = sbr.rel (0) target = $region24
    $region23: #{tpu_custom_call.1} parent=1 // pred_region
      %73 = dma.done [#allocation7], 128
    $region24: #{tpu_custom_call.1} parent=1 // pred_fallthru
      _
    %74 = vsyncpa [#allocation6], 1
    %75 = vsyncpa [#allocation7], 1

</llo_original>
